<compile_context>
chip_gen: v5e
topology: v5e:2x2
jax: 0.10.0
libtpu: 0.0.40
codegen_flags: <defaults>
</compile_context>

<pallas_src>
import jax
import jax.numpy as jnp
from jax.experimental import pallas as pl
from jax.experimental.pallas import tpu as pltpu


def _freq_pos_encoding_kernel(x_ref, a_ref, o_ref):
    # x_ref / o_ref: (bt, D, ft, tt) block.  a_ref: (1, D, ft, 1) f32 parameter block.
    x = x_ref[...].astype(jnp.float32)                  # f32 accumulation
    eng = jnp.sum(x * x, axis=1, keepdims=True)         # (bt, 1, ft, tt)  major-axis VPU reduce
    amp = jnp.sqrt(eng + 1e-8)                          # EUP
    a = a_ref[...]                                      # (1, D, ft, 1) f32; broadcasts over batch + lanes
    o_ref[...] = (a * amp + x).astype(o_ref.dtype)      # fused scale-add, cast back to input dtype


def _pick_block(B, D, F, T, itemsize,
                target_bytes=1 << 20,      # aim for >= ~1 MiB per block (roofline sweet spot)
                cap_bytes=4 << 20):        # cap so 2x(in)+2x(out) double buffers stay ~<=16 MiB
    """Pick (bt, ft, tt) block dims; D is always kept whole (it is the reduce axis)."""
    # Lane (time) tile: largest multiple of 128 <= T when T >= 128, else the full (small) T.
    tt = (T // 128) * 128 if T >= 128 else T

    def blk_bytes(ft_, tt_, bt_=1):
        return bt_ * D * ft_ * tt_ * itemsize

    # Freq (sublane) tile must be a multiple of 8, or the full F.
    ft_min = F if F < 8 else 8
    while tt > 128 and blk_bytes(ft_min, tt) > cap_bytes:
        tt -= 128

    ft = cap_bytes // max(D * tt * itemsize, 1)
    if ft >= F:
        ft = F
    else:
        ft = max(ft_min, (ft // 8) * 8)

    # Block multiple batch elements together when one (D, ft, tt) slab is still tiny,
    # so small-D / short-T workloads are not dominated by the ~0.35 us per-step cost.
    bt = 1
    blk = blk_bytes(ft, tt)
    if 0 < blk < target_bytes:
        bt = min(B, max(1, min(target_bytes // blk, cap_bytes // blk)))
    return bt, ft, tt


def freq_pos_encoding(x, adds):
    """x: (B, D, F, T) NCHW; adds: (1, D, F, 1). Returns adds * sqrt(sum_d x^2 + 1e-8) + x."""
    B, D, F_, T_ = x.shape
    assert adds.shape == (1, D, F_, 1), adds.shape

    itemsize = jnp.dtype(x.dtype).itemsize
    bt, ft, tt = _pick_block(B, D, F_, T_, itemsize)
    grid = (pl.cdiv(B, bt), pl.cdiv(F_, ft), pl.cdiv(T_, tt))

    # Keep the parameter in f32 (matches the PyTorch/JAX reference exactly, even for bf16 x);
    # it is tiny, so the extra bytes are negligible.
    adds_f32 = adds.astype(jnp.float32)

    return pl.pallas_call(
        _freq_pos_encoding_kernel,
        out_shape=jax.ShapeDtypeStruct((B, D, F_, T_), x.dtype),
        grid=grid,
        in_specs=[
            # x: one (bt, D, ft, tt) tile per grid step — lane-dense when T >= 128.
            pl.BlockSpec((bt, D, ft, tt), lambda b, f, t: (b, 0, f, t)),
            # adds: tiny (1, D, ft, 1) block; index depends only on the freq axis, so it is
            # resident (no re-DMA) across consecutive time/batch steps.
            pl.BlockSpec((1, D, ft, 1), lambda b, f, t: (0, 0, f, 0)),
        ],
        out_specs=pl.BlockSpec((bt, D, ft, tt), lambda b, f, t: (b, 0, f, t)),
        compiler_params=pltpu.CompilerParams(
            dimension_semantics=("parallel", "parallel", "parallel"),
            vmem_limit_bytes=32 * 1024 * 1024),
    )(x, adds_f32)


def freq_pos_encoding_ref(x, adds):
    """Pure-JAX reference mirroring the PyTorch forward exactly."""
    xf = x.astype(jnp.float32)
    eng = jnp.sum(xf * xf, axis=1, keepdims=True)
    amp = jnp.sqrt(eng + 1e-8)
    return (adds.astype(jnp.float32) * amp + xf).astype(x.dtype)


if __name__ == "__main__":
    B, D, F_, T_ = 2, 4, 16, 16   # (batch, dims, freqs, time)

    key = jax.random.PRNGKey(0)
    kx, ka = jax.random.split(key)
    x = jax.random.normal(kx, (B, D, F_, T_), jnp.float32)
    adds = jax.random.normal(ka, (1, D, F_, 1), jnp.float32)   # nn.Parameter(torch.randn(1, dims, freqs, 1))

    out = jax.block_until_ready(freq_pos_encoding(x, adds))
    ref = freq_pos_encoding_ref(x, adds)

    assert out.shape == (B, D, F_, T_), out.shape
    if not jnp.allclose(out, ref, atol=1e-5, rtol=1e-5):
        max_err = jnp.max(jnp.abs(out - ref))
        raise AssertionError(f"Pallas kernel mismatch vs reference, max_err={max_err}")

    print("KERNEL_OK")
</pallas_src>

<mosaic_0001>
module attributes {stable_mosaic.version = 11 : i64} {
  func.func @_freq_pos_encoding_kernel(%arg0: i32, %arg1: i32, %arg2: i32, %arg3: memref<2x4x16x16xf32, #tpu.memory_space<vmem>>, %arg4: memref<1x4x16x1xf32, #tpu.memory_space<vmem>>, %arg5: memref<2x4x16x16xf32, #tpu.memory_space<vmem>>) attributes {dimension_semantics = [#tpu.dimension_semantics<parallel>, #tpu.dimension_semantics<parallel>, #tpu.dimension_semantics<parallel>], iteration_bounds = array<i64: 1, 1, 1>, scalar_prefetch = 0 : i64, scratch_operands = 0 : i64, tpu.core_type = #tpu.core_type<tc>, window_params = [{transform_indices = @transform_0, window_bounds = array<i64: 2, 4, 16, 16>}, {transform_indices = @transform_1, window_bounds = array<i64: 1, 4, 16, 1>}, {transform_indices = @transform_2, window_bounds = array<i64: 2, 4, 16, 16>}]} {
    %c0 = arith.constant 0 : index
    %c0_0 = arith.constant 0 : index
    %c0_1 = arith.constant 0 : index
    %c0_2 = arith.constant 0 : index
    %0 = vector.load %arg3[%c0, %c0_0, %c0_1, %c0_2] : memref<2x4x16x16xf32, #tpu.memory_space<vmem>>, vector<2x4x16x16xf32>
    %1 = arith.mulf %0, %0 : vector<2x4x16x16xf32>
    %cst = arith.constant dense<0.000000e+00> : vector<2x16x16xf32>
    %2 = vector.multi_reduction <add>, %1, %cst [1] : vector<2x4x16x16xf32> to vector<2x16x16xf32>
    %3 = vector.shape_cast %2 : vector<2x16x16xf32> to vector<2x1x16x16xf32>
    %cst_3 = arith.constant 9.99999993E-9 : f32
    %4 = vector.broadcast %cst_3 : f32 to vector<2x1x16x16xf32>
    %5 = arith.addf %3, %4 : vector<2x1x16x16xf32>
    %6 = math.sqrt %5 : vector<2x1x16x16xf32>
    %c0_4 = arith.constant 0 : index
    %c0_5 = arith.constant 0 : index
    %c0_6 = arith.constant 0 : index
    %c0_7 = arith.constant 0 : index
    %7 = vector.load %arg4[%c0_4, %c0_5, %c0_6, %c0_7] : memref<1x4x16x1xf32, #tpu.memory_space<vmem>>, vector<1x4x16x1xf32>
    %8 = vector.broadcast %7 : vector<1x4x16x1xf32> to vector<2x4x16x16xf32>
    %9 = vector.broadcast %6 : vector<2x1x16x16xf32> to vector<2x4x16x16xf32>
    %10 = arith.mulf %8, %9 : vector<2x4x16x16xf32>
    %11 = arith.addf %10, %0 : vector<2x4x16x16xf32>
    %c0_8 = arith.constant 0 : index
    %c0_9 = arith.constant 0 : index
    %c0_10 = arith.constant 0 : index
    %c0_11 = arith.constant 0 : index
    %12 = vector.load %arg5[%c0_8, %c0_9, %c0_10, %c0_11] : memref<2x4x16x16xf32, #tpu.memory_space<vmem>>, vector<2x4x16x16xf32>
    tpu.vector_store %arg5[%c0_8, %c0_9, %c0_10, %c0_11], %11 {strides = array<i32>} : memref<2x4x16x16xf32, #tpu.memory_space<vmem>>, vector<2x4x16x16xf32>,
    return
  }
  func.func @transform_0(%arg0: i32, %arg1: i32, %arg2: i32) -> (i32, i32, i32, i32) {
    %c0_i32 = arith.constant 0 : i32
    %c0_i32_0 = arith.constant 0 : i32
    return %arg0, %c0_i32, %arg1, %arg2 : i32, i32, i32, i32
  }
  func.func @transform_1(%arg0: i32, %arg1: i32, %arg2: i32) -> (i32, i32, i32, i32) {
    %c0_i32 = arith.constant 0 : i32
    %c0_i32_0 = arith.constant 0 : i32
    %c0_i32_1 = arith.constant 0 : i32
    %c0_i32_2 = arith.constant 0 : i32
    return %c0_i32, %c0_i32_0, %arg1, %c0_i32_1 : i32, i32, i32, i32
  }
  func.func @transform_2(%arg0: i32, %arg1: i32, %arg2: i32) -> (i32, i32, i32, i32) {
    %c0_i32 = arith.constant 0 : i32
    %c0_i32_0 = arith.constant 0 : i32
    return %arg0, %c0_i32, %arg1, %arg2 : i32, i32, i32, i32
  }
}

</mosaic_0001>

<llo_original>
// kernel: tpu_custom_call.1
$region0: #{tpu_custom_call.1}
  #allocation0 [shape = 'u32[]', space=smem, size = 0x4, offset = 0x4, fixed_abs, tag = 'smem constant byte address 0x4 - core index']
  #allocation1 [shape = 'u32[72,128]{1,0:T(1,128)}', space=vmem, size = 0x9000, scoped, tag = 'internal scratch']
  %s0 = inlined_call_operand.hbm [shape: f32[2,4,16,16], index: 0, kind: input, shape index: {}]
  %s1 = inlined_call_operand.vmem [shape: f32[1,4,16,1], index: 1, kind: input, shape index: {}]
  %s2 = inlined_call_operand.hbm [shape: f32[2,4,16,16], index: 2, kind: output, shape index: {}]
  %s3 = sld [smem:[#allocation0]]
  $region22: #{tpu_custom_call.1} parent=0
    _
  %s5 = ssub.s32 1, %s3
  %s6 = scalar_select 0, %s5, %s3
  $region1: #{tpu_custom_call.1} parent=0
    #allocation2 [shape = 'u8[65536]{0}', space=vmem, size = 0x10000, scoped, tag = 'input window, operand 0, single buffered']
    #allocation3 [shape = 's32[1]{0}', space=sflag, size = 0x4, scoped, tag = 'scoped memory for tpu_custom_call.1']
    #allocation4 [shape = 's32[1]{0}', space=sflag, size = 0x4, scoped, tag = 'scoped memory for tpu_custom_call.1']
    #allocation5 [shape = 'u8[65536]{0}', space=vmem, size = 0x10000, scoped, tag = 'output window, operand 0, single buffered']
    %7 = vsyncpa [#allocation3], 0
    %8 = vsyncpa [#allocation4], 0
    // Predicated region
    $region2: #{tpu_custom_call.1} parent=1 // pred_check
      _
    $region3: #{tpu_custom_call.1} parent=1 // pred_check_branch
      %10 = sbr.rel (0) target = $region5
    $region4: #{tpu_custom_call.1} parent=1 // pred_region
      %12 = vsyncadd [#allocation3], 0
      %s13 = sshll.u32 %s0, 4
      %s14 = int_to_ptr.hbm [resolvable:$true] %s13
      %s15 = sshll.u32 [#allocation2], 4
      %s16 = int_to_ptr.vmem [resolvable:$true] %s15
      %21 = dma.hbm_to_vmem [thread:$0]  %s14, 2048, %s16, [#allocation3], 128, 128, 8
    $region5: #{tpu_custom_call.1} parent=1 // pred_fallthru
      _
    // Predicated region
    $region6: #{tpu_custom_call.1} parent=1 // pred_check
      _
    $region7: #{tpu_custom_call.1} parent=1 // pred_check_branch
      %23 = sbr.rel (0) target = $region9
    $region8: #{tpu_custom_call.1} parent=1 // pred_region
      _
    $region9: #{tpu_custom_call.1} parent=1 // pred_fallthru
      _
    // Predicated region
    $region10: #{tpu_custom_call.1} parent=1 // pred_check
      _
    $region11: #{tpu_custom_call.1} parent=1 // pred_check_branch
      %25 = sbr.rel (0) target = $region13
    $region12: #{tpu_custom_call.1} parent=1 // pred_region
      %27 = dma.done [#allocation3], 2048
    $region13: #{tpu_custom_call.1} parent=1 // pred_fallthru
      _
    %v28 = vld [vmem:[#allocation2] sm:$0xff]
    %v29 = vld [vmem:[#allocation2 + $0x8] sm:$0xff]
    %v30 = vld [vmem:[#allocation2 + $0x10] sm:$0xff]
    %v31 = vld [vmem:[#allocation2 + $0x18] sm:$0xff]
    %v32 = vld [vmem:[#allocation2 + $0x20] sm:$0xff]
    %v33 = vld [vmem:[#allocation2 + $0x28] sm:$0xff]
    %v34 = vld [vmem:[#allocation2 + $0x30] sm:$0xff]
    %v35 = vld [vmem:[#allocation2 + $0x38] sm:$0xff]
    %v36 = vld [vmem:[#allocation2 + $0x40] sm:$0xff]
    %v37 = vld [vmem:[#allocation2 + $0x48] sm:$0xff]
    %v38 = vld [vmem:[#allocation2 + $0x50] sm:$0xff]
    %v39 = vld [vmem:[#allocation2 + $0x58] sm:$0xff]
    %v40 = vld [vmem:[#allocation2 + $0x60] sm:$0xff]
    %v41 = vld [vmem:[#allocation2 + $0x68] sm:$0xff]
    %v42 = vld [vmem:[#allocation2 + $0x70] sm:$0xff]
    %v43 = vld [vmem:[#allocation2 + $0x78] sm:$0xff]
    %v44 = vmul.f32 %v28, %v28
    %v45 = vmul.f32 %v29, %v29
    %v46 = vmul.f32 %v30, %v30
    %v47 = vmul.f32 %v31, %v31
    %v48 = vmul.f32 %v32, %v32
    %v49 = vmul.f32 %v33, %v33
    %v50 = vmul.f32 %v34, %v34
    %v51 = vmul.f32 %v35, %v35
    %v52 = vmul.f32 %v36, %v36
    %v53 = vmul.f32 %v37, %v37
    %v54 = vmul.f32 %v38, %v38
    %v55 = vmul.f32 %v39, %v39
    %v56 = vmul.f32 %v40, %v40
    %v57 = vmul.f32 %v41, %v41
    %v58 = vmul.f32 %v42, %v42
    %v59 = vmul.f32 %v43, %v43
    %vm60 = vcmask 130048
    %v61 = vsel %vm60, %v44, 0.0
    %v62 = vsel %vm60, %v46, 0.0
    %v63 = vadd.f32 %v61, %v62
    %v64 = vsel %vm60, %v48, 0.0
    %v65 = vadd.f32 %v63, %v64
    %v66 = vsel %vm60, %v50, 0.0
    %v67 = vadd.f32 %v65, %v66
    %v68 = vsel %vm60, %v45, 0.0
    %v69 = vsel %vm60, %v47, 0.0
    %v70 = vadd.f32 %v68, %v69
    %v71 = vsel %vm60, %v49, 0.0
    %v72 = vadd.f32 %v70, %v71
    %v73 = vsel %vm60, %v51, 0.0
    %v74 = vadd.f32 %v72, %v73
    %v75 = vsel %vm60, %v52, 0.0
    %v76 = vsel %vm60, %v54, 0.0
    %v77 = vadd.f32 %v75, %v76
    %v78 = vsel %vm60, %v56, 0.0
    %v79 = vadd.f32 %v77, %v78
    %v80 = vsel %vm60, %v58, 0.0
    %v81 = vadd.f32 %v79, %v80
    %v82 = vsel %vm60, %v53, 0.0
    %v83 = vsel %vm60, %v55, 0.0
    %v84 = vadd.f32 %v82, %v83
    %v85 = vsel %vm60, %v57, 0.0
    %v86 = vadd.f32 %v84, %v85
    %v87 = vsel %vm60, %v59, 0.0
    %v88 = vadd.f32 %v86, %v87
    %v89 = vadd.f32 %v67, 1e-08
    %v90 = vadd.f32 %v74, 1e-08
    %v91 = vadd.f32 %v81, 1e-08
    %v92 = vadd.f32 %v88, 1e-08
    %v93 = vrsqrt.pop %v89
    %v94 = vmul.f32 %v93, %v89
    %v95 = vmul.f32 %v94, %v93
    %v96 = vmul.f32 0.5, %v95
    %v97 = vsub.f32 1.5, %v96
    %v98 = vmul.f32 %v93, %v97
    %v99 = vmul.f32 %v89, %v98
    %vm100 = vcmp.eq.f32.partialorder %v89, inf
    %v101 = vsel %vm100, %v89, %v99
    %vm102 = vcmp.eq.f32.partialorder %v89, 0.0
    %v103 = vand.u32 %v89, 2147483648
    %v104 = vsel %vm102, %v103, %v101
    %v105 = vrsqrt.pop %v90
    %v106 = vmul.f32 %v105, %v90
    %v107 = vmul.f32 %v106, %v105
    %v108 = vmul.f32 0.5, %v107
    %v109 = vsub.f32 1.5, %v108
    %v110 = vmul.f32 %v105, %v109
    %v111 = vmul.f32 %v90, %v110
    %vm112 = vcmp.eq.f32.partialorder %v90, inf
    %v113 = vsel %vm112, %v90, %v111
    %vm114 = vcmp.eq.f32.partialorder %v90, 0.0
    %v115 = vand.u32 %v90, 2147483648
    %v116 = vsel %vm114, %v115, %v113
    %v117 = vrsqrt.pop %v91
    %v118 = vmul.f32 %v117, %v91
    %v119 = vmul.f32 %v118, %v117
    %v120 = vmul.f32 0.5, %v119
    %v121 = vsub.f32 1.5, %v120
    %v122 = vmul.f32 %v117, %v121
    %v123 = vmul.f32 %v91, %v122
    %vm124 = vcmp.eq.f32.partialorder %v91, inf
    %v125 = vsel %vm124, %v91, %v123
    %vm126 = vcmp.eq.f32.partialorder %v91, 0.0
    %v127 = vand.u32 %v91, 2147483648
    %v128 = vsel %vm126, %v127, %v125
    %v129 = vrsqrt.pop %v92
    %v130 = vmul.f32 %v129, %v92
    %v131 = vmul.f32 %v130, %v129
    %v132 = vmul.f32 0.5, %v131
    %v133 = vsub.f32 1.5, %v132
    %v134 = vmul.f32 %v129, %v133
    %v135 = vmul.f32 %v92, %v134
    %vm136 = vcmp.eq.f32.partialorder %v92, inf
    %v137 = vsel %vm136, %v92, %v135
    %vm138 = vcmp.eq.f32.partialorder %v92, 0.0
    %v139 = vand.u32 %v92, 2147483648
    %v140 = vsel %vm138, %v139, %v137
    %v141 = vld [vmem:[%s1] sm:$0xff]
    %v142 = vld [vmem:[%s1 + $0x8] sm:$0xff]
    %v143 = vld [vmem:[%s1 + $0x10] sm:$0xff]
    %v144 = vld [vmem:[%s1 + $0x18] sm:$0xff]
    %v145 = vld [vmem:[%s1 + $0x20] sm:$0xff]
    %v146 = vld [vmem:[%s1 + $0x28] sm:$0xff]
    %v147 = vld [vmem:[%s1 + $0x30] sm:$0xff]
    %v148 = vld [vmem:[%s1 + $0x38] sm:$0xff]
    %150 = vset.pattern.permute.xlu0 0
    %151 = vperm.xlu0 %150, %v141
    %v152 = vpop.permute.xlu0 %151
    %155 = vset.pattern.permute.xlu0 0
    %156 = vperm.xlu0 %155, %v142
    %v157 = vpop.permute.xlu0 %156
    %160 = vset.pattern.permute.xlu0 0
    %161 = vperm.xlu0 %160, %v143
    %v162 = vpop.permute.xlu0 %161
    %165 = vset.pattern.permute.xlu0 0
    %166 = vperm.xlu0 %165, %v144
    %v167 = vpop.permute.xlu0 %166
    %170 = vset.pattern.permute.xlu0 0
    %171 = vperm.xlu0 %170, %v145
    %v172 = vpop.permute.xlu0 %171
    %175 = vset.pattern.permute.xlu0 0
    %176 = vperm.xlu0 %175, %v146
    %v177 = vpop.permute.xlu0 %176
    %180 = vset.pattern.permute.xlu0 0
    %181 = vperm.xlu0 %180, %v147
    %v182 = vpop.permute.xlu0 %181
    %185 = vset.pattern.permute.xlu0 0
    %186 = vperm.xlu0 %185, %v148
    %v187 = vpop.permute.xlu0 %186
    %v189 = vmul.f32 %v152, %v104
    %v190 = vmul.f32 %v157, %v116
    %v191 = vmul.f32 %v162, %v104
    %v192 = vmul.f32 %v167, %v116
    %v193 = vmul.f32 %v172, %v104
    %v194 = vmul.f32 %v177, %v116
    %v195 = vmul.f32 %v182, %v104
    %v196 = vmul.f32 %v187, %v116
    %v197 = vmul.f32 %v152, %v128
    %v198 = vmul.f32 %v157, %v140
    %v199 = vmul.f32 %v162, %v128
    %v200 = vmul.f32 %v167, %v140
    %v201 = vmul.f32 %v172, %v128
    %v202 = vmul.f32 %v177, %v140
    %v203 = vmul.f32 %v182, %v128
    %v204 = vmul.f32 %v187, %v140
    %v205 = vadd.f32 %v189, %v28
    %v206 = vadd.f32 %v190, %v29
    %v207 = vadd.f32 %v191, %v30
    %v208 = vadd.f32 %v192, %v31
    %v209 = vadd.f32 %v193, %v32
    %v210 = vadd.f32 %v194, %v33
    %v211 = vadd.f32 %v195, %v34
    %v212 = vadd.f32 %v196, %v35
    %v213 = vadd.f32 %v197, %v36
    %v214 = vadd.f32 %v198, %v37
    %v215 = vadd.f32 %v199, %v38
    %v216 = vadd.f32 %v200, %v39
    %v217 = vadd.f32 %v201, %v40
    %v218 = vadd.f32 %v202, %v41
    %v219 = vadd.f32 %v203, %v42
    %v220 = vadd.f32 %v204, %v43
    %221 = vst.msk [vmem:[#allocation5] sm:$0xff] %vm60, %v205
    %222 = vst.msk [vmem:[#allocation5 + $0x8] sm:$0xff] %vm60, %v206
    %223 = vst.msk [vmem:[#allocation5 + $0x10] sm:$0xff] %vm60, %v207
    %224 = vst.msk [vmem:[#allocation5 + $0x18] sm:$0xff] %vm60, %v208
    %225 = vst.msk [vmem:[#allocation5 + $0x20] sm:$0xff] %vm60, %v209
    %226 = vst.msk [vmem:[#allocation5 + $0x28] sm:$0xff] %vm60, %v210
    %227 = vst.msk [vmem:[#allocation5 + $0x30] sm:$0xff] %vm60, %v211
    %228 = vst.msk [vmem:[#allocation5 + $0x38] sm:$0xff] %vm60, %v212
    %229 = vst.msk [vmem:[#allocation5 + $0x40] sm:$0xff] %vm60, %v213
    %230 = vst.msk [vmem:[#allocation5 + $0x48] sm:$0xff] %vm60, %v214
    %231 = vst.msk [vmem:[#allocation5 + $0x50] sm:$0xff] %vm60, %v215
    %232 = vst.msk [vmem:[#allocation5 + $0x58] sm:$0xff] %vm60, %v216
    %233 = vst.msk [vmem:[#allocation5 + $0x60] sm:$0xff] %vm60, %v217
    %234 = vst.msk [vmem:[#allocation5 + $0x68] sm:$0xff] %vm60, %v218
    %235 = vst.msk [vmem:[#allocation5 + $0x70] sm:$0xff] %vm60, %v219
    %236 = vst.msk [vmem:[#allocation5 + $0x78] sm:$0xff] %vm60, %v220
    // Predicated region
    $region14: #{tpu_custom_call.1} parent=1 // pred_check
      _
    $region15: #{tpu_custom_call.1} parent=1 // pred_check_branch
      %238 = sbr.rel (0) target = $region17
    $region16: #{tpu_custom_call.1} parent=1 // pred_region
      %240 = vsyncadd [#allocation4], 0
      %s241 = sshll.u32 [#allocation5], 4
      %s242 = int_to_ptr.vmem [resolvable:$true] %s241
      %s243 = sshll.u32 %s2, 4
      %s244 = int_to_ptr.hbm [resolvable:$true] %s243
      %249 = dma.vmem_to_hbm [thread:$0]  %s242, 2048, %s244, [#allocation4], 128, 128, 8
    $region17: #{tpu_custom_call.1} parent=1 // pred_fallthru
      _
    // Predicated region
    $region18: #{tpu_custom_call.1} parent=1 // pred_check
      _
    $region19: #{tpu_custom_call.1} parent=1 // pred_check_branch
      %251 = sbr.rel (0) target = $region21
    $region20: #{tpu_custom_call.1} parent=1 // pred_region
      %253 = dma.done [#allocation4], 2048
    $region21: #{tpu_custom_call.1} parent=1 // pred_fallthru
      _
    %254 = vsyncpa [#allocation3], 1
    %255 = vsyncpa [#allocation4], 1

</llo_original>
